<compile_context>
chip_gen: v7x
topology: tpu7x:2x2x1
jax: 0.10.0
libtpu: 0.0.40
codegen_flags: <defaults>
</compile_context>

<pallas_src>
import jax
import jax.numpy as jnp
import numpy as np
from jax.experimental import pallas as pl
from jax.experimental.pallas import tpu as pltpu


def _elu(x):
    # F.elu with alpha=1:  x if x > 0 else exp(x) - 1
    return jnp.where(x > 0, x, jnp.exp(jnp.minimum(x, 0.0)) - 1.0)


def make_nsm_cell_kernel(N, E, B, P, H):
    PH = P * H

    def kernel(node_feats_ref, edge_attrs_ref, instr_ref, rhs_nodes_ref, dist_ref,
               node_idx_ref, edge_src_ref, edge_dst_ref, edge_batch_ref,
               w_np_ref, w_edge_ref, w_nscore_ref, w_rscore_ref,
               out_ref):
        f32 = jnp.float32

        # ---------- node -> graph one-hot membership (N, B) ----------
        node_idx = node_idx_ref[...]                                   # (N,1) i32
        iota_nb = jax.lax.broadcasted_iota(jnp.int32, (N, B), 1)
        M_bool = iota_nb == node_idx
        M = M_bool.astype(f32)                                         # (N,B)

        # ---------- fused per-node gather: one thin matmul instead of three ----------
        # rhs_nodes = [ tile(instr, P) | repeat(prop_sim, H) | rel_sim ]  (B, 2*P*H+1)
        gathered = jnp.dot(M, rhs_nodes_ref[...],
                           preferred_element_type=f32)                 # (N, 2PH+1)
        instr_tiled_n = gathered[:, :PH]                               # (N, P*H)
        prop_rep_n = gathered[:, PH:2 * PH]                            # (N, P*H)
        rel_n = gathered[:, 2 * PH:2 * PH + 1]                         # (N, 1)

        # ---------- node scores: single matmul with K = P*H ----------
        scaled = prop_rep_n * instr_tiled_n * node_feats_ref[...]      # (N, P*H)
        node_scores = _elu(jnp.dot(scaled, w_np_ref[...],
                                   preferred_element_type=f32))        # (N, H)

        # ---------- edge scores ----------
        edge_batch = edge_batch_ref[...]                               # (E,1)
        iota_eb = jax.lax.broadcasted_iota(jnp.int32, (E, B), 1)
        Meb = (iota_eb == edge_batch).astype(f32)                      # (E,B)
        instr_e = jnp.dot(Meb, instr_ref[...], preferred_element_type=f32)  # (E,H)
        edge_scores = _elu(jnp.dot(instr_e * edge_attrs_ref[...],
                                   w_edge_ref[...],
                                   preferred_element_type=f32))        # (E,H)

        # ---------- re-associated scatter: project edges to scalars first ----------
        # edge_proj[e] = edge_scores[e,:] @ w_relation_score   (VPU mul + lane reduce)
        edge_proj = jnp.sum(edge_scores * w_rscore_ref[...],
                            axis=1, keepdims=True)                     # (E,1)

        # distribution gathered at source node (one-hot mask * row, lane reduce)
        edge_src = edge_src_ref[...]                                   # (E,1)
        iota_en = jax.lax.broadcasted_iota(jnp.int32, (E, N), 1)
        S_src = (iota_en == edge_src).astype(f32)                      # (E,N)
        dist_src = jnp.sum(S_src * dist_ref[...],
                           axis=1, keepdims=True)                      # (E,1)

        edge_rel = dist_src * edge_proj                                # (E,1)

        # scatter-add the per-edge scalars into destination nodes
        edge_dst = edge_dst_ref[...]                                   # (1,E)
        iota_ne = jax.lax.broadcasted_iota(jnp.int32, (N, E), 0)
        S_dst = (iota_ne == edge_dst).astype(f32)                      # (N,E)
        rel_score = jnp.dot(S_dst, edge_rel,
                            preferred_element_type=f32)                # (N,1)

        # per-node state score (VPU mul + lane reduce, no width-1 matmul)
        state_score = jnp.sum(node_scores * w_nscore_ref[...],
                              axis=1, keepdims=True)                   # (N,1)

        # ---------- scatter_softmax within each graph of the batch ----------
        neg_big = jnp.float32(-1e30)

        def group_softmax(s):                                          # s: (N,1)
            masked = jnp.where(M_bool, s, neg_big)                     # (N,B)
            gmax = jnp.max(masked, axis=0, keepdims=True)              # (1,B)
            node_max = jnp.sum(M * gmax, axis=1, keepdims=True)        # (N,1)
            e = jnp.exp(s - node_max)                                  # (N,1)
            gsum = jnp.sum(M * e, axis=0, keepdims=True)               # (1,B)
            node_sum = jnp.sum(M * gsum, axis=1, keepdims=True)        # (N,1)
            # divide -> EUP reciprocal (otherwise-idle slot)
            return e * pl.reciprocal(node_sum, approx=True)

        next_states = group_softmax(state_score)                       # (N,1)
        next_rel = group_softmax(rel_score)                            # (N,1)

        out_ref[...] = rel_n * next_rel + (1.0 - rel_n) * next_states

    return kernel


def nsm_cell_forward(node_attrs, edge_attrs, edge_indices, node_indices,
                     edge_batch_indices, instruction, distribution,
                     node_prop_similarities, relation_similarity, params):
    N, P, H = node_attrs.shape
    E = edge_attrs.shape[0]
    B = instruction.shape[0]

    kernel = make_nsm_cell_kernel(N, E, B, P, H)

    # Host-side layout plumbing (free): flatten the property axis into the
    # contraction, stack the property weights, and pre-expand the per-graph
    # broadcast operands so the kernel gathers everything with ONE thin matmul.
    node_feats = node_attrs.reshape(N, P * H).astype(jnp.float32)
    w_np_flat = params["weight_node_properties"].reshape(P * H, H).astype(jnp.float32)
    rhs_nodes = jnp.concatenate(
        [jnp.tile(instruction.astype(jnp.float32), (1, P)),                    # (B, P*H)
         jnp.repeat(node_prop_similarities.astype(jnp.float32), H, axis=1),    # (B, P*H)
         relation_similarity.reshape(B, 1).astype(jnp.float32)],               # (B, 1)
        axis=1)                                                                # (B, 2*P*H+1)

    args = (
        node_feats,
        edge_attrs.astype(jnp.float32),
        instruction.astype(jnp.float32),
        rhs_nodes,
        distribution.reshape(1, N).astype(jnp.float32),
        node_indices.reshape(N, 1).astype(jnp.int32),
        edge_indices[0].reshape(E, 1).astype(jnp.int32),
        edge_indices[1].reshape(1, E).astype(jnp.int32),
        edge_batch_indices.reshape(E, 1).astype(jnp.int32),
        w_np_flat,
        params["weight_edge"].astype(jnp.float32),
        params["weight_node_score"].reshape(1, H).astype(jnp.float32),
        params["weight_relation_score"].reshape(1, H).astype(jnp.float32),
    )

    out = pl.pallas_call(
        kernel,
        out_shape=jax.ShapeDtypeStruct((N, 1), jnp.float32),
        in_specs=[pl.BlockSpec(memory_space=pltpu.MemorySpace.VMEM)] * len(args),
        out_specs=pl.BlockSpec(memory_space=pltpu.MemorySpace.VMEM),
    )(*args)
    return out[:, 0]


def nsm_cell_reference(node_attrs, edge_attrs, edge_indices, node_indices,
                       edge_batch_indices, instruction, distribution,
                       node_prop_similarities, relation_similarity, params):
    """Pure-JAX reference mirroring the PyTorch forward semantics."""
    N = node_attrs.shape[0]
    B = instruction.shape[0]
    elu = _elu

    instr_n = instruction[node_indices]                          # (N,H)
    prop_n = node_prop_similarities[node_indices]                # (N,P)
    scaled = prop_n[:, :, None] * instr_n[:, None, :] * node_attrs   # (N,P,H)
    node_scores = elu(jnp.einsum("nph,phk->nk", scaled,
                                 params["weight_node_properties"]))

    instr_e = instruction[edge_batch_indices]                    # (E,H)
    edge_scores = elu((instr_e * edge_attrs) @ params["weight_edge"])

    msg = distribution[edge_indices[0], None] * edge_scores      # (E,H)
    agg = jax.ops.segment_sum(msg, edge_indices[1], num_segments=N)

    state_score = node_scores @ params["weight_node_score"]      # (N,)
    rel_score = agg @ params["weight_relation_score"]            # (N,)

    def scatter_softmax(s, idx, num_groups):
        gmax = jax.ops.segment_max(s, idx, num_segments=num_groups)
        e = jnp.exp(s - gmax[idx])
        gsum = jax.ops.segment_sum(e, idx, num_segments=num_groups)
        return e / gsum[idx]

    next_states = scatter_softmax(state_score, node_indices, B)
    next_rel = scatter_softmax(rel_score, node_indices, B)
    rel_n = relation_similarity[node_indices]
    return rel_n * next_rel + (1 - rel_n) * next_states


if __name__ == "__main__":
    # Small synthetic problem: B graphs, P node properties, H hidden size.
    B, P, H = 2, 4, 32
    nodes_per_graph = 6
    N = B * nodes_per_graph            # 12 nodes total
    edges_per_graph = 10
    E = B * edges_per_graph            # 20 edges total

    key = jax.random.PRNGKey(0)
    keys = jax.random.split(key, 12)

    # Parameters (torch.rand -> uniform [0,1))
    params = {
        "weight_node_properties": jax.random.uniform(keys[0], (P, H, H), jnp.float32),
        "weight_edge":            jax.random.uniform(keys[1], (H, H), jnp.float32),
        "weight_node_score":      jax.random.uniform(keys[2], (H,), jnp.float32),
        "weight_relation_score":  jax.random.uniform(keys[3], (H,), jnp.float32),
    }

    # Graph batch data
    node_indices = jnp.repeat(jnp.arange(B, dtype=jnp.int32), nodes_per_graph)   # (N,)
    node_attrs = jax.random.normal(keys[4], (N, P, H), jnp.float32)
    edge_attrs = jax.random.normal(keys[5], (E, H), jnp.float32)

    # Edges stay inside their own graph.
    src_local = jax.random.randint(keys[6], (B, edges_per_graph), 0, nodes_per_graph)
    dst_local = jax.random.randint(keys[7], (B, edges_per_graph), 0, nodes_per_graph)
    offsets = (jnp.arange(B, dtype=jnp.int32) * nodes_per_graph)[:, None]
    edge_src = (src_local + offsets).reshape(-1).astype(jnp.int32)
    edge_dst = (dst_local + offsets).reshape(-1).astype(jnp.int32)
    edge_indices = jnp.stack([edge_src, edge_dst], axis=0)                        # (2,E)
    edge_batch_indices = node_indices[edge_src]                                   # (E,)

    # Other inputs
    instruction = jax.random.normal(keys[8], (B, H), jnp.float32)
    raw = jax.random.uniform(keys[9], (N,), jnp.float32) + 0.1
    per_graph_sum = jax.ops.segment_sum(raw, node_indices, num_segments=B)
    distribution = raw / per_graph_sum[node_indices]                              # (N,)
    node_prop_similarities = jax.random.uniform(keys[10], (B, P), jnp.float32)
    relation_similarity = jax.random.uniform(keys[11], (B,), jnp.float32)

    out = nsm_cell_forward(node_attrs, edge_attrs, edge_indices, node_indices,
                           edge_batch_indices, instruction, distribution,
                           node_prop_similarities, relation_similarity, params)
    out = jax.block_until_ready(out)

    ref = nsm_cell_reference(node_attrs, edge_attrs, edge_indices, node_indices,
                             edge_batch_indices, instruction, distribution,
                             node_prop_similarities, relation_similarity, params)
    ref = jax.block_until_ready(ref)

    # Tolerance loosened (1e-4 -> ~1e-3) because the softmax denominators now use
    # the EUP approximate reciprocal (pl.reciprocal(..., approx=True)).
    np.testing.assert_allclose(np.asarray(out), np.asarray(ref), rtol=2e-3, atol=1e-3)
    print("KERNEL_OK")
</pallas_src>

<mosaic_0001>
module attributes {stable_mosaic.version = 11 : i64} {
  func.func @kernel(%arg0: memref<12x128xf32, #tpu.memory_space<vmem>>, %arg1: memref<20x32xf32, #tpu.memory_space<vmem>>, %arg2: memref<2x32xf32, #tpu.memory_space<vmem>>, %arg3: memref<2x257xf32, #tpu.memory_space<vmem>>, %arg4: memref<1x12xf32, #tpu.memory_space<vmem>>, %arg5: memref<12x1xi32, #tpu.memory_space<vmem>>, %arg6: memref<20x1xi32, #tpu.memory_space<vmem>>, %arg7: memref<1x20xi32, #tpu.memory_space<vmem>>, %arg8: memref<20x1xi32, #tpu.memory_space<vmem>>, %arg9: memref<128x32xf32, #tpu.memory_space<vmem>>, %arg10: memref<32x32xf32, #tpu.memory_space<vmem>>, %arg11: memref<1x32xf32, #tpu.memory_space<vmem>>, %arg12: memref<1x32xf32, #tpu.memory_space<vmem>>, %arg13: memref<12x1xf32, #tpu.memory_space<vmem>>) attributes {dimension_semantics = [], scalar_prefetch = 0 : i64, scratch_operands = 0 : i64, tpu.core_type = #tpu.core_type<tc>} {
    %c0 = arith.constant 0 : index
    %c0_0 = arith.constant 0 : index
    %0 = vector.load %arg5[%c0, %c0_0] : memref<12x1xi32, #tpu.memory_space<vmem>>, vector<12x1xi32>
    %1 = tpu.iota {dimensions = array<i32: 1>} : vector<12x2xi32>
    %2 = vector.broadcast %0 : vector<12x1xi32> to vector<12x2xi32>
    %3 = arith.cmpi eq, %1, %2 : vector<12x2xi32>
    %4 = arith.extui %3 : vector<12x2xi1> to vector<12x2xi32>
    %5 = arith.sitofp %4 : vector<12x2xi32> to vector<12x2xf32>
    %c0_1 = arith.constant 0 : index
    %c0_2 = arith.constant 0 : index
    %6 = vector.load %arg3[%c0_1, %c0_2] : memref<2x257xf32, #tpu.memory_space<vmem>>, vector<2x257xf32>
    %cst = arith.constant dense<0.000000e+00> : vector<12x257xf32>
    %7 = tpu.matmul %5, %6, %cst {dimension_numbers = #tpu.dot_dimension_numbers<[1], [0], [0], [1], [0, 0, 1, 1], [], []>} : vector<12x2xf32>, vector<2x257xf32>, vector<12x257xf32> -> vector<12x257xf32>
    %8 = vector.extract_strided_slice %7 {offsets = [0, 0], sizes = [12, 128], strides = [1, 1]} : vector<12x257xf32> to vector<12x128xf32>
    %9 = vector.extract_strided_slice %7 {offsets = [0, 128], sizes = [12, 128], strides = [1, 1]} : vector<12x257xf32> to vector<12x128xf32>
    %10 = vector.extract_strided_slice %7 {offsets = [0, 256], sizes = [12, 1], strides = [1, 1]} : vector<12x257xf32> to vector<12x1xf32>
    %11 = arith.mulf %9, %8 : vector<12x128xf32>
    %c0_3 = arith.constant 0 : index
    %c0_4 = arith.constant 0 : index
    %12 = vector.load %arg0[%c0_3, %c0_4] : memref<12x128xf32, #tpu.memory_space<vmem>>, vector<12x128xf32>
    %13 = arith.mulf %11, %12 : vector<12x128xf32>
    %c0_5 = arith.constant 0 : index
    %c0_6 = arith.constant 0 : index
    %14 = vector.load %arg9[%c0_5, %c0_6] : memref<128x32xf32, #tpu.memory_space<vmem>>, vector<128x32xf32>
    %cst_7 = arith.constant dense<0.000000e+00> : vector<12x32xf32>
    %15 = tpu.matmul %13, %14, %cst_7 {dimension_numbers = #tpu.dot_dimension_numbers<[1], [0], [0], [1], [0, 0, 1, 1], [], []>} : vector<12x128xf32>, vector<128x32xf32>, vector<12x32xf32> -> vector<12x32xf32>
    %cst_8 = arith.constant 0.000000e+00 : f32
    %16 = vector.broadcast %cst_8 : f32 to vector<12x32xf32>
    %17 = arith.cmpf ogt, %15, %16 : vector<12x32xf32>
    %cst_9 = arith.constant 0.000000e+00 : f32
    %18 = vector.broadcast %cst_9 : f32 to vector<12x32xf32>
    %19 = arith.minimumf %15, %18 : vector<12x32xf32>
    %20 = math.exp %19 : vector<12x32xf32>
    %cst_10 = arith.constant 1.000000e+00 : f32
    %21 = vector.broadcast %cst_10 : f32 to vector<12x32xf32>
    %22 = arith.subf %20, %21 : vector<12x32xf32>
    %23 = arith.select %17, %15, %22 : vector<12x32xi1>, vector<12x32xf32>
    %c0_11 = arith.constant 0 : index
    %c0_12 = arith.constant 0 : index
    %24 = vector.load %arg8[%c0_11, %c0_12] : memref<20x1xi32, #tpu.memory_space<vmem>>, vector<20x1xi32>
    %25 = tpu.iota {dimensions = array<i32: 1>} : vector<20x2xi32>
    %26 = vector.broadcast %24 : vector<20x1xi32> to vector<20x2xi32>
    %27 = arith.cmpi eq, %25, %26 : vector<20x2xi32>
    %28 = arith.extui %27 : vector<20x2xi1> to vector<20x2xi32>
    %29 = arith.sitofp %28 : vector<20x2xi32> to vector<20x2xf32>
    %c0_13 = arith.constant 0 : index
    %c0_14 = arith.constant 0 : index
    %30 = vector.load %arg2[%c0_13, %c0_14] : memref<2x32xf32, #tpu.memory_space<vmem>>, vector<2x32xf32>
    %cst_15 = arith.constant dense<0.000000e+00> : vector<20x32xf32>
    %31 = tpu.matmul %29, %30, %cst_15 {dimension_numbers = #tpu.dot_dimension_numbers<[1], [0], [0], [1], [0, 0, 1, 1], [], []>} : vector<20x2xf32>, vector<2x32xf32>, vector<20x32xf32> -> vector<20x32xf32>
    %c0_16 = arith.constant 0 : index
    %c0_17 = arith.constant 0 : index
    %32 = vector.load %arg1[%c0_16, %c0_17] : memref<20x32xf32, #tpu.memory_space<vmem>>, vector<20x32xf32>
    %33 = arith.mulf %31, %32 : vector<20x32xf32>
    %c0_18 = arith.constant 0 : index
    %c0_19 = arith.constant 0 : index
    %34 = vector.load %arg10[%c0_18, %c0_19] : memref<32x32xf32, #tpu.memory_space<vmem>>, vector<32x32xf32>
    %cst_20 = arith.constant dense<0.000000e+00> : vector<20x32xf32>
    %35 = tpu.matmul %33, %34, %cst_20 {dimension_numbers = #tpu.dot_dimension_numbers<[1], [0], [0], [1], [0, 0, 1, 1], [], []>} : vector<20x32xf32>, vector<32x32xf32>, vector<20x32xf32> -> vector<20x32xf32>
    %cst_21 = arith.constant 0.000000e+00 : f32
    %36 = vector.broadcast %cst_21 : f32 to vector<20x32xf32>
    %37 = arith.cmpf ogt, %35, %36 : vector<20x32xf32>
    %cst_22 = arith.constant 0.000000e+00 : f32
    %38 = vector.broadcast %cst_22 : f32 to vector<20x32xf32>
    %39 = arith.minimumf %35, %38 : vector<20x32xf32>
    %40 = math.exp %39 : vector<20x32xf32>
    %cst_23 = arith.constant 1.000000e+00 : f32
    %41 = vector.broadcast %cst_23 : f32 to vector<20x32xf32>
    %42 = arith.subf %40, %41 : vector<20x32xf32>
    %43 = arith.select %37, %35, %42 : vector<20x32xi1>, vector<20x32xf32>
    %c0_24 = arith.constant 0 : index
    %c0_25 = arith.constant 0 : index
    %44 = vector.load %arg12[%c0_24, %c0_25] : memref<1x32xf32, #tpu.memory_space<vmem>>, vector<1x32xf32>
    %45 = vector.broadcast %44 : vector<1x32xf32> to vector<20x32xf32>
    %46 = arith.mulf %43, %45 : vector<20x32xf32>
    %cst_26 = arith.constant dense<0.000000e+00> : vector<20xf32>
    %47 = vector.multi_reduction <add>, %46, %cst_26 [1] : vector<20x32xf32> to vector<20xf32>
    %48 = vector.shape_cast %47 : vector<20xf32> to vector<20x1xf32>
    %c0_27 = arith.constant 0 : index
    %c0_28 = arith.constant 0 : index
    %49 = vector.load %arg6[%c0_27, %c0_28] : memref<20x1xi32, #tpu.memory_space<vmem>>, vector<20x1xi32>
    %50 = tpu.iota {dimensions = array<i32: 1>} : vector<20x12xi32>
    %51 = vector.broadcast %49 : vector<20x1xi32> to vector<20x12xi32>
    %52 = arith.cmpi eq, %50, %51 : vector<20x12xi32>
    %53 = arith.extui %52 : vector<20x12xi1> to vector<20x12xi32>
    %54 = arith.sitofp %53 : vector<20x12xi32> to vector<20x12xf32>
    %c0_29 = arith.constant 0 : index
    %c0_30 = arith.constant 0 : index
    %55 = vector.load %arg4[%c0_29, %c0_30] : memref<1x12xf32, #tpu.memory_space<vmem>>, vector<1x12xf32>
    %56 = vector.broadcast %55 : vector<1x12xf32> to vector<20x12xf32>
    %57 = arith.mulf %54, %56 : vector<20x12xf32>
    %cst_31 = arith.constant dense<0.000000e+00> : vector<20xf32>
    %58 = vector.multi_reduction <add>, %57, %cst_31 [1] : vector<20x12xf32> to vector<20xf32>
    %59 = vector.shape_cast %58 : vector<20xf32> to vector<20x1xf32>
    %60 = arith.mulf %59, %48 : vector<20x1xf32>
    %c0_32 = arith.constant 0 : index
    %c0_33 = arith.constant 0 : index
    %61 = vector.load %arg7[%c0_32, %c0_33] : memref<1x20xi32, #tpu.memory_space<vmem>>, vector<1x20xi32>
    %62 = tpu.iota {dimensions = array<i32: 0>} : vector<12x20xi32>
    %63 = vector.broadcast %61 : vector<1x20xi32> to vector<12x20xi32>
    %64 = arith.cmpi eq, %62, %63 : vector<12x20xi32>
    %65 = arith.extui %64 : vector<12x20xi1> to vector<12x20xi32>
    %66 = arith.sitofp %65 : vector<12x20xi32> to vector<12x20xf32>
    %cst_34 = arith.constant dense<0.000000e+00> : vector<12x1xf32>
    %67 = tpu.matmul %66, %60, %cst_34 {dimension_numbers = #tpu.dot_dimension_numbers<[1], [0], [0], [1], [0, 0, 1, 1], [], []>} : vector<12x20xf32>, vector<20x1xf32>, vector<12x1xf32> -> vector<12x1xf32>
    %c0_35 = arith.constant 0 : index
    %c0_36 = arith.constant 0 : index
    %68 = vector.load %arg11[%c0_35, %c0_36] : memref<1x32xf32, #tpu.memory_space<vmem>>, vector<1x32xf32>
    %69 = vector.broadcast %68 : vector<1x32xf32> to vector<12x32xf32>
    %70 = arith.mulf %23, %69 : vector<12x32xf32>
    %cst_37 = arith.constant dense<0.000000e+00> : vector<12xf32>
    %71 = vector.multi_reduction <add>, %70, %cst_37 [1] : vector<12x32xf32> to vector<12xf32>
    %72 = vector.shape_cast %71 : vector<12xf32> to vector<12x1xf32>
    %cst_38 = arith.constant -1.000000e+30 : f32
    %73 = vector.shape_cast %72 : vector<12x1xf32> to vector<12x1xf32>
    %74 = vector.broadcast %73 : vector<12x1xf32> to vector<12x2xf32>
    %75 = vector.broadcast %cst_38 : f32 to vector<12x2xf32>
    %76 = arith.select %3, %74, %75 : vector<12x2xi1>, vector<12x2xf32>
    %cst_39 = arith.constant dense<0xFF800000> : vector<2xf32>
    %77 = vector.multi_reduction <maximumf>, %76, %cst_39 [0] : vector<12x2xf32> to vector<2xf32>
    %78 = vector.shape_cast %77 : vector<2xf32> to vector<1x2xf32>
    %79 = vector.broadcast %78 : vector<1x2xf32> to vector<12x2xf32>
    %80 = arith.mulf %5, %79 : vector<12x2xf32>
    %cst_40 = arith.constant dense<0.000000e+00> : vector<12xf32>
    %81 = vector.multi_reduction <add>, %80, %cst_40 [1] : vector<12x2xf32> to vector<12xf32>
    %82 = vector.shape_cast %81 : vector<12xf32> to vector<12x1xf32>
    %83 = arith.subf %72, %82 : vector<12x1xf32>
    %84 = math.exp %83 : vector<12x1xf32>
    %85 = vector.broadcast %84 : vector<12x1xf32> to vector<12x2xf32>
    %86 = arith.mulf %5, %85 : vector<12x2xf32>
    %cst_41 = arith.constant dense<0.000000e+00> : vector<2xf32>
    %87 = vector.multi_reduction <add>, %86, %cst_41 [0] : vector<12x2xf32> to vector<2xf32>
    %88 = vector.shape_cast %87 : vector<2xf32> to vector<1x2xf32>
    %89 = vector.broadcast %88 : vector<1x2xf32> to vector<12x2xf32>
    %90 = arith.mulf %5, %89 : vector<12x2xf32>
    %cst_42 = arith.constant dense<0.000000e+00> : vector<12xf32>
    %91 = vector.multi_reduction <add>, %90, %cst_42 [1] : vector<12x2xf32> to vector<12xf32>
    %92 = vector.shape_cast %91 : vector<12xf32> to vector<12x1xf32>
    %93 = tpu.reciprocal %92 {approx = true} : vector<12x1xf32> -> vector<12x1xf32>
    %94 = arith.mulf %84, %93 : vector<12x1xf32>
    %cst_43 = arith.constant -1.000000e+30 : f32
    %95 = vector.shape_cast %67 : vector<12x1xf32> to vector<12x1xf32>
    %96 = vector.broadcast %95 : vector<12x1xf32> to vector<12x2xf32>
    %97 = vector.broadcast %cst_43 : f32 to vector<12x2xf32>
    %98 = arith.select %3, %96, %97 : vector<12x2xi1>, vector<12x2xf32>
    %cst_44 = arith.constant dense<0xFF800000> : vector<2xf32>
    %99 = vector.multi_reduction <maximumf>, %98, %cst_44 [0] : vector<12x2xf32> to vector<2xf32>
    %100 = vector.shape_cast %99 : vector<2xf32> to vector<1x2xf32>
    %101 = vector.broadcast %100 : vector<1x2xf32> to vector<12x2xf32>
    %102 = arith.mulf %5, %101 : vector<12x2xf32>
    %cst_45 = arith.constant dense<0.000000e+00> : vector<12xf32>
    %103 = vector.multi_reduction <add>, %102, %cst_45 [1] : vector<12x2xf32> to vector<12xf32>
    %104 = vector.shape_cast %103 : vector<12xf32> to vector<12x1xf32>
    %105 = arith.subf %67, %104 : vector<12x1xf32>
    %106 = math.exp %105 : vector<12x1xf32>
    %107 = vector.broadcast %106 : vector<12x1xf32> to vector<12x2xf32>
    %108 = arith.mulf %5, %107 : vector<12x2xf32>
    %cst_46 = arith.constant dense<0.000000e+00> : vector<2xf32>
    %109 = vector.multi_reduction <add>, %108, %cst_46 [0] : vector<12x2xf32> to vector<2xf32>
    %110 = vector.shape_cast %109 : vector<2xf32> to vector<1x2xf32>
    %111 = vector.broadcast %110 : vector<1x2xf32> to vector<12x2xf32>
    %112 = arith.mulf %5, %111 : vector<12x2xf32>
    %cst_47 = arith.constant dense<0.000000e+00> : vector<12xf32>
    %113 = vector.multi_reduction <add>, %112, %cst_47 [1] : vector<12x2xf32> to vector<12xf32>
    %114 = vector.shape_cast %113 : vector<12xf32> to vector<12x1xf32>
    %115 = tpu.reciprocal %114 {approx = true} : vector<12x1xf32> -> vector<12x1xf32>
    %116 = arith.mulf %106, %115 : vector<12x1xf32>
    %117 = arith.mulf %10, %116 : vector<12x1xf32>
    %cst_48 = arith.constant 1.000000e+00 : f32
    %118 = vector.broadcast %cst_48 : f32 to vector<12x1xf32>
    %119 = arith.subf %118, %10 : vector<12x1xf32>
    %120 = arith.mulf %119, %94 : vector<12x1xf32>
    %121 = arith.addf %117, %120 : vector<12x1xf32>
    %c0_49 = arith.constant 0 : index
    %c0_50 = arith.constant 0 : index
    %122 = vector.load %arg13[%c0_49, %c0_50] : memref<12x1xf32, #tpu.memory_space<vmem>>, vector<12x1xf32>
    tpu.vector_store %arg13[%c0_49, %c0_50], %121 {strides = array<i32>} : memref<12x1xf32, #tpu.memory_space<vmem>>, vector<12x1xf32>,
    return
  }
}

</mosaic_0001>

<llo_original>
// kernel: tpu_custom_call.1
$region0: #{tpu_custom_call.1}
  #allocation0 [shape = 'u32[]', space=smem, size = 0x4, offset = 0x4, fixed_abs, tag = 'smem constant byte address 0x4 - core index']
  #allocation1 [shape = 'u32[144,128]{1,0:T(1,128)}', space=vmem, size = 0x12000, scoped, tag = 'internal scratch']
  %s0 = inlined_call_operand.vmem [shape: f32[12,128], index: 0, kind: input, shape index: {}]
  %s1 = inlined_call_operand.vmem [shape: f32[20,32], index: 1, kind: input, shape index: {}]
  %s2 = inlined_call_operand.vmem [shape: f32[2,32], index: 2, kind: input, shape index: {}]
  %s3 = inlined_call_operand.vmem [shape: f32[2,257], index: 3, kind: input, shape index: {}]
  %s4 = inlined_call_operand.vmem [shape: f32[1,12], index: 4, kind: input, shape index: {}]
  %s5 = inlined_call_operand.vmem [shape: s32[12,1], index: 5, kind: input, shape index: {}]
  %s6 = inlined_call_operand.vmem [shape: s32[20,1], index: 6, kind: input, shape index: {}]
  %s7 = inlined_call_operand.vmem [shape: s32[1,20], index: 7, kind: input, shape index: {}]
  %s8 = inlined_call_operand.vmem [shape: s32[20,1], index: 8, kind: input, shape index: {}]
  %s9 = inlined_call_operand.vmem [shape: f32[128,32], index: 9, kind: input, shape index: {}]
  %s10 = inlined_call_operand.vmem [shape: f32[32,32], index: 10, kind: input, shape index: {}]
  %s11 = inlined_call_operand.vmem [shape: f32[1,32], index: 11, kind: input, shape index: {}]
  %s12 = inlined_call_operand.vmem [shape: f32[1,32], index: 12, kind: input, shape index: {}]
  %s13 = inlined_call_operand.vmem [shape: f32[12,1], index: 13, kind: output, shape index: {}]
  %s14 = sld [smem:[#allocation0]]
  $region62: #{tpu_custom_call.1} parent=0
    _
  %s16 = ssub.s32 1, %s14
  %s17 = scalar_select 0, %s16, %s14
  // Predicated region
  $region2: #{tpu_custom_call.1} parent=0 // pred_check
    _
  $region3: #{tpu_custom_call.1} parent=0 // pred_check_branch
    %19 = sbr.rel (0) target = $region5
  $region4: #{tpu_custom_call.1} parent=0 // pred_region
    _
  $region5: #{tpu_custom_call.1} parent=0 // pred_fallthru
    _
  // Predicated region
  $region6: #{tpu_custom_call.1} parent=0 // pred_check
    _
  $region7: #{tpu_custom_call.1} parent=0 // pred_check_branch
    %21 = sbr.rel (0) target = $region9
  $region8: #{tpu_custom_call.1} parent=0 // pred_region
    _
  $region9: #{tpu_custom_call.1} parent=0 // pred_fallthru
    _
  // Predicated region
  $region10: #{tpu_custom_call.1} parent=0 // pred_check
    _
  $region11: #{tpu_custom_call.1} parent=0 // pred_check_branch
    %23 = sbr.rel (0) target = $region13
  $region12: #{tpu_custom_call.1} parent=0 // pred_region
    _
  $region13: #{tpu_custom_call.1} parent=0 // pred_fallthru
    _
  // Predicated region
  $region14: #{tpu_custom_call.1} parent=0 // pred_check
    _
  $region15: #{tpu_custom_call.1} parent=0 // pred_check_branch
    %25 = sbr.rel (0) target = $region17
  $region16: #{tpu_custom_call.1} parent=0 // pred_region
    _
  $region17: #{tpu_custom_call.1} parent=0 // pred_fallthru
    _
  // Predicated region
  $region18: #{tpu_custom_call.1} parent=0 // pred_check
    _
  $region19: #{tpu_custom_call.1} parent=0 // pred_check_branch
    %27 = sbr.rel (0) target = $region21
  $region20: #{tpu_custom_call.1} parent=0 // pred_region
    _
  $region21: #{tpu_custom_call.1} parent=0 // pred_fallthru
    _
  // Predicated region
  $region22: #{tpu_custom_call.1} parent=0 // pred_check
    _
  $region23: #{tpu_custom_call.1} parent=0 // pred_check_branch
    %29 = sbr.rel (0) target = $region25
  $region24: #{tpu_custom_call.1} parent=0 // pred_region
    _
  $region25: #{tpu_custom_call.1} parent=0 // pred_fallthru
    _
  // Predicated region
  $region26: #{tpu_custom_call.1} parent=0 // pred_check
    _
  $region27: #{tpu_custom_call.1} parent=0 // pred_check_branch
    %31 = sbr.rel (0) target = $region29
  $region28: #{tpu_custom_call.1} parent=0 // pred_region
    _
  $region29: #{tpu_custom_call.1} parent=0 // pred_fallthru
    _
  // Predicated region
  $region30: #{tpu_custom_call.1} parent=0 // pred_check
    _
  $region31: #{tpu_custom_call.1} parent=0 // pred_check_branch
    %33 = sbr.rel (0) target = $region33
  $region32: #{tpu_custom_call.1} parent=0 // pred_region
    _
  $region33: #{tpu_custom_call.1} parent=0 // pred_fallthru
    _
  // Predicated region
  $region34: #{tpu_custom_call.1} parent=0 // pred_check
    _
  $region35: #{tpu_custom_call.1} parent=0 // pred_check_branch
    %35 = sbr.rel (0) target = $region37
  $region36: #{tpu_custom_call.1} parent=0 // pred_region
    _
  $region37: #{tpu_custom_call.1} parent=0 // pred_fallthru
    _
  // Predicated region
  $region38: #{tpu_custom_call.1} parent=0 // pred_check
    _
  $region39: #{tpu_custom_call.1} parent=0 // pred_check_branch
    %37 = sbr.rel (0) target = $region41
  $region40: #{tpu_custom_call.1} parent=0 // pred_region
    _
  $region41: #{tpu_custom_call.1} parent=0 // pred_fallthru
    _
  // Predicated region
  $region42: #{tpu_custom_call.1} parent=0 // pred_check
    _
  $region43: #{tpu_custom_call.1} parent=0 // pred_check_branch
    %39 = sbr.rel (0) target = $region45
  $region44: #{tpu_custom_call.1} parent=0 // pred_region
    _
  $region45: #{tpu_custom_call.1} parent=0 // pred_fallthru
    _
  // Predicated region
  $region46: #{tpu_custom_call.1} parent=0 // pred_check
    _
  $region47: #{tpu_custom_call.1} parent=0 // pred_check_branch
    %41 = sbr.rel (0) target = $region49
  $region48: #{tpu_custom_call.1} parent=0 // pred_region
    _
  $region49: #{tpu_custom_call.1} parent=0 // pred_fallthru
    _
  // Predicated region
  $region50: #{tpu_custom_call.1} parent=0 // pred_check
    _
  $region51: #{tpu_custom_call.1} parent=0 // pred_check_branch
    %43 = sbr.rel (0) target = $region53
  $region52: #{tpu_custom_call.1} parent=0 // pred_region
    _
  $region53: #{tpu_custom_call.1} parent=0 // pred_fallthru
    _
  %v44 = vld [vmem:[%s5] sm:$0xff]
  %v45 = vld [vmem:[%s5 + $0x8] sm:$0xf]
  %v46 = vlaneseq
  %v47 = vand.u32 %v46, 127
  %48 = vset.pattern.permute.xlu0 0
  %49 = vperm.xlu0 %48, %v44
  %v50 = vpop.permute.xlu0 %49
  %51 = vset.pattern.permute.xlu0 0
  %52 = vperm.xlu0 %51, %v45
  %v53 = vpop.permute.xlu0 %52
  %vm54 = vcmp.eq.s32.totalorder %v47, %v50
  %vm55 = vcmp.eq.s32.totalorder %v47, %v53
  %v56 = vsel %vm54, 1, 0
  %v57 = vsel %vm55, 1, 0
  %v58 = vcvt.s32.f32 %v56
  %v59 = vcvt.s32.f32 %v57
  %v60 = vld [vmem:[%s3] sm:$0x3f]
  %v62 = vcombine.high %v60, %v60
  %v64 = vunpack.c.l.s4 1983009808
  %v65 = vunpack.c.0.s8 %v64
  %v66 = vlaneseq
  %v67 = vshrl.u32 %v66, 7
  %v68 = vsub.s32 %v65, %v67
  %v69 = vrot.slane %v60, %v68
  %v71 = vunpack.c.l.s4 1983009808
  %v72 = vunpack.c.0.s8 %v71
  %v73 = vlaneseq
  %v74 = vshrl.u32 %v73, 7
  %v75 = vsub.s32 %v72, %v74
  %v76 = vrot.slane %v62, %v75
  %v77 = vcombine.high %v69, %v69
  %vm78 = vcmask 15360
  %v80 = vsel %vm78, %v58, 0
  %v83 = vsel %vm78, %v59, 0
  %vm85 = vcmask 1041408
  %v86 = vsel %vm85, %v69, 0
  %v88 = vsel %vm85, %v77, 0
  %v90 = vsel %vm85, %v76, 0
  %92 = vmatprep.subr.mxu0 %v88
  %93 = vmatpush1.msra.mxu0 %v86
  %94 = vmatprep.subr.mxu0 0.0
  %95 = vmatpush1.msra.mxu0 0.0
  %96 = vmatprep.subr.mxu0 0.0
  %97 = vmatpush1.msra.mxu0 0.0
  %98 = vmatprep.subr.mxu0 0.0
  %99 = vmatpush1.msra.mxu0 0.0
  %100 = vmatprep.subr.mxu0 0.0
  %101 = vmatpush1.msra.mxu0 0.0
  %102 = vmatprep.subr.mxu0 0.0
  %103 = vmatpush1.msra.mxu0 0.0
  %104 = vmatprep.subr.mxu0 0.0
  %105 = vmatpush1.msra.mxu0 0.0
  %106 = vmatprep.subr.mxu0 0.0
  %107 = vmatpush1.msra.mxu0 0.0
  %108 = vmatprep.subr.mxu0 0.0
  %109 = vmatpush1.msra.mxu0 0.0
  %110 = vmatprep.subr.mxu0 0.0
  %111 = vmatpush1.msra.mxu0 0.0
  %112 = vmatprep.subr.mxu0 0.0
  %113 = vmatpush1.msra.mxu0 0.0
  %114 = vmatprep.subr.mxu0 0.0
  %115 = vmatpush1.msra.mxu0 0.0
  %116 = vmatprep.subr.mxu0 0.0
  %117 = vmatpush1.msra.mxu0 0.0
  %118 = vmatprep.subr.mxu0 0.0
  %119 = vmatpush1.msra.mxu0 0.0
  %120 = vmatprep.subr.mxu0 0.0
  %121 = vmatpush1.msra.mxu0 0.0
  %122 = vmatprep.subr.mxu0 0.0
  %123 = vmatpush1.msra.mxu0 0.0
  %124 = vmatprep.subr.mxu0 0.0
  %125 = vmatpush1.msra.mxu0 0.0
  %126 = vmatprep.subr.mxu0 0.0
  %127 = vmatpush1.msra.mxu0 0.0
  %128 = vmatprep.subr.mxu0 0.0
  %129 = vmatpush1.msra.mxu0 0.0
  %130 = vmatprep.subr.mxu0 0.0
  %131 = vmatpush1.msra.mxu0 0.0
  %132 = vmatprep.subr.mxu0 0.0
  %133 = vmatpush1.msra.mxu0 0.0
  %134 = vmatprep.subr.mxu0 0.0
  %135 = vmatpush1.msra.mxu0 0.0
  %136 = vmatprep.subr.mxu0 0.0
  %137 = vmatpush1.msra.mxu0 0.0
  %138 = vmatprep.subr.mxu0 0.0
  %139 = vmatpush1.msra.mxu0 0.0
  %140 = vmatprep.subr.mxu0 0.0
  %141 = vmatpush1.msra.mxu0 0.0
  %142 = vmatprep.subr.mxu0 0.0
  %143 = vmatpush1.msra.mxu0 0.0
  %144 = vmatprep.subr.mxu0 0.0
  %145 = vmatpush1.msra.mxu0 0.0
  %146 = vmatprep.subr.mxu0 0.0
  %147 = vmatpush1.msra.mxu0 0.0
  %148 = vmatprep.subr.mxu0 0.0
  %149 = vmatpush1.msra.mxu0 0.0
  %150 = vmatprep.subr.mxu0 0.0
  %151 = vmatpush1.msra.mxu0 0.0
  %152 = vmatprep.subr.mxu0 0.0
  %153 = vmatpush1.msra.mxu0 0.0
  %154 = vmatprep.subr.mxu0 0.0
  %155 = vmatpush1.msra.mxu0 0.0
  %156 = vmatprep.mubr.f32.mxu0 0.0
  %157 = vmatmul.mubr.f32.gmra.mrb[0].mxu0 %v80
  %v158 = vpop.f32.mrb[0].mxu0
  %v159 = vadd.f32 0.0, %v158
  %v160 = vpop.f32.mrb[0].mxu0
  %v161 = vadd.f32 0.0, %v160
  %162 = vmatprep.mubr.f32.mxu0 0.0
  %163 = vmatmul.mubr.f32.gmra.mrb[0].mxu0 %v83
  %v164 = vpop.f32.mrb[0].mxu0
  %v165 = vadd.f32 0.0, %v164
  %v166 = vpop.f32.mrb[0].mxu0
  %v167 = vadd.f32 0.0, %v166
  %168 = vdwg.mxu0
  %169 = vmatprep.subr.mxu0 0.0
  %170 = vmatpush1.msra.mxu0 %v90
  %171 = vmatprep.subr.mxu0 0.0
  %172 = vmatpush1.msra.mxu0 0.0
  %173 = vmatprep.subr.mxu0 0.0
  %174 = vmatpush1.msra.mxu0 0.0
  %175 = vmatprep.subr.mxu0 0.0
  %176 = vmatpush1.msra.mxu0 0.0
  %177 = vmatprep.subr.mxu0 0.0
  %178 = vmatpush1.msra.mxu0 0.0
  %179 = vmatprep.subr.mxu0 0.0
  %180 = vmatpush1.msra.mxu0 0.0
  %181 = vmatprep.subr.mxu0 0.0
  %182 = vmatpush1.msra.mxu0 0.0
  %183 = vmatprep.subr.mxu0 0.0
  %184 = vmatpush1.msra.mxu0 0.0
  %185 = vmatprep.subr.mxu0 0.0
  %186 = vmatpush1.msra.mxu0 0.0
  %187 = vmatprep.subr.mxu0 0.0
  %188 = vmatpush1.msra.mxu0 0.0
  %189 = vmatprep.subr.mxu0 0.0
  %190 = vmatpush1.msra.mxu0 0.0
  %191 = vmatprep.subr.mxu0 0.0
  %192 = vmatpush1.msra.mxu0 0.0
  %193 = vmatprep.subr.mxu0 0.0
  %194 = vmatpush1.msra.mxu0 0.0
  %195 = vmatprep.subr.mxu0 0.0
  %196 = vmatpush1.msra.mxu0 0.0
  %197 = vmatprep.subr.mxu0 0.0
  %198 = vmatpush1.msra.mxu0 0.0
  %199 = vmatprep.subr.mxu0 0.0
  %200 = vmatpush1.msra.mxu0 0.0
  %201 = vmatprep.subr.mxu0 0.0
  %202 = vmatpush1.msra.mxu0 0.0
  %203 = vmatprep.subr.mxu0 0.0
  %204 = vmatpush1.msra.mxu0 0.0
  %205 = vmatprep.subr.mxu0 0.0
  %206 = vmatpush1.msra.mxu0 0.0
  %207 = vmatprep.subr.mxu0 0.0
  %208 = vmatpush1.msra.mxu0 0.0
  %209 = vmatprep.subr.mxu0 0.0
  %210 = vmatpush1.msra.mxu0 0.0
  %211 = vmatprep.subr.mxu0 0.0
  %212 = vmatpush1.msra.mxu0 0.0
  %213 = vmatprep.subr.mxu0 0.0
  %214 = vmatpush1.msra.mxu0 0.0
  %215 = vmatprep.subr.mxu0 0.0
  %216 = vmatpush1.msra.mxu0 0.0
  %217 = vmatprep.subr.mxu0 0.0
  %218 = vmatpush1.msra.mxu0 0.0
  %219 = vmatprep.subr.mxu0 0.0
  %220 = vmatpush1.msra.mxu0 0.0
  %221 = vmatprep.subr.mxu0 0.0
  %222 = vmatpush1.msra.mxu0 0.0
  %223 = vmatprep.subr.mxu0 0.0
  %224 = vmatpush1.msra.mxu0 0.0
  %225 = vmatprep.subr.mxu0 0.0
  %226 = vmatpush1.msra.mxu0 0.0
  %227 = vmatprep.subr.mxu0 0.0
  %228 = vmatpush1.msra.mxu0 0.0
  %229 = vmatprep.subr.mxu0 0.0
  %230 = vmatpush1.msra.mxu0 0.0
  %231 = vmatprep.subr.mxu0 0.0
  %232 = vmatpush1.msra.mxu0 0.0
  %233 = vmatprep.mubr.f32.mxu0 0.0
  %234 = vmatmul.mubr.f32.gmra.mrb[0].mxu0 %v80
  %v235 = vpop.f32.mrb[0].mxu0
  %v236 = vadd.f32 0.0, %v235
  %v237 = vpop.f32.mrb[0].mxu0
  %238 = vmatprep.mubr.f32.mxu0 0.0
  %239 = vmatmul.mubr.f32.gmra.mrb[0].mxu0 %v83
  %v240 = vpop.f32.mrb[0].mxu0
  %v241 = vadd.f32 0.0, %v240
  %v242 = vpop.f32.mrb[0].mxu0
  %243 = vdwg.mxu0
  %v244 = vmul.f32 %v161, %v159
  %v245 = vmul.f32 %v167, %v165
  %v246 = vld [vmem:[%s0] sm:$0xff]
  %v247 = vld [vmem:[%s0 + $0x8] sm:$0xf]
  %v248 = vmul.f32 %v244, %v246
  %v249 = vmul.f32 %v245, %v247
  %v250 = vld [vmem:[%s9] sm:$0xff]
  %v251 = vld [vmem:[%s9 + $0x8] sm:$0xff]
  %v252 = vld [vmem:[%s9 + $0x10] sm:$0xff]
  %v253 = vld [vmem:[%s9 + $0x18] sm:$0xff]
  %v254 = vld [vmem:[%s9 + $0x20] sm:$0xff]
  %v255 = vld [vmem:[%s9 + $0x28] sm:$0xff]
  %v256 = vld [vmem:[%s9 + $0x30] sm:$0xff]
  %v257 = vld [vmem:[%s9 + $0x38] sm:$0xff]
  %v258 = vld [vmem:[%s9 + $0x40] sm:$0xff]
  %v259 = vld [vmem:[%s9 + $0x48] sm:$0xff]
  %v260 = vld [vmem:[%s9 + $0x50] sm:$0xff]
  %v261 = vld [vmem:[%s9 + $0x58] sm:$0xff]
  %v262 = vld [vmem:[%s9 + $0x60] sm:$0xff]
  %v263 = vld [vmem:[%s9 + $0x68] sm:$0xff]
  %v264 = vld [vmem:[%s9 + $0x70] sm:$0xff]
  %v265 = vld [vmem:[%s9 + $0x78] sm:$0xff]
  %266 = vmatprep.subr.mxu0 0.0
  %267 = vmatpush1.msra.mxu0 %v250
  %268 = vmatprep.subr.mxu0 0.0
  %269 = vmatpush1.msra.mxu0 %v251
  %270 = vmatprep.subr.mxu0 0.0
  %271 = vmatpush1.msra.mxu0 %v252
  %272 = vmatprep.subr.mxu0 0.0
  %273 = vmatpush1.msra.mxu0 %v253
  %274 = vmatprep.subr.mxu0 0.0
  %275 = vmatpush1.msra.mxu0 %v254
  %276 = vmatprep.subr.mxu0 0.0
  %277 = vmatpush1.msra.mxu0 %v255
  %278 = vmatprep.subr.mxu0 0.0
  %279 = vmatpush1.msra.mxu0 %v256
  %280 = vmatprep.subr.mxu0 0.0
  %281 = vmatpush1.msra.mxu0 %v257
  %282 = vmatprep.subr.mxu0 0.0
  %283 = vmatpush1.msra.mxu0 %v258
  %284 = vmatprep.subr.mxu0 0.0
  %285 = vmatpush1.msra.mxu0 %v259
  %286 = vmatprep.subr.mxu0 0.0
  %287 = vmatpush1.msra.mxu0 %v260
  %288 = vmatprep.subr.mxu0 0.0
  %289 = vmatpush1.msra.mxu0 %v261
  %290 = vmatprep.subr.mxu0 0.0
  %291 = vmatpush1.msra.mxu0 %v262
  %292 = vmatprep.subr.mxu0 0.0
  %293 = vmatpush1.msra.mxu0 %v263
  %294 = vmatprep.subr.mxu0 0.0
  %295 = vmatpush1.msra.mxu0 %v264
  %296 = vmatprep.subr.mxu0 0.0
  %297 = vmatpush1.msra.mxu0 %v265
  %298 = vmatprep.subr.mxu0 0.0
  %299 = vmatpush1.msra.mxu0 0.0
  %300 = vmatprep.subr.mxu0 0.0
  %301 = vmatpush1.msra.mxu0 0.0
  %302 = vmatprep.subr.mxu0 0.0
  %303 = vmatpush1.msra.mxu0 0.0
  %304 = vmatprep.subr.mxu0 0.0
  %305 = vmatpush1.msra.mxu0 0.0
  %306 = vmatprep.subr.mxu0 0.0
  %307 = vmatpush1.msra.mxu0 0.0
  %308 = vmatprep.subr.mxu0 0.0
  %309 = vmatpush1.msra.mxu0 0.0
  %310 = vmatprep.subr.mxu0 0.0
  %311 = vmatpush1.msra.mxu0 0.0
  %312 = vmatprep.subr.mxu0 0.0
  %313 = vmatpush1.msra.mxu0 0.0
  %314 = vmatprep.subr.mxu0 0.0
  %315 = vmatpush1.msra.mxu0 0.0
  %316 = vmatprep.subr.mxu0 0.0
  %317 = vmatpush1.msra.mxu0 0.0
  %318 = vmatprep.subr.mxu0 0.0
  %319 = vmatpush1.msra.mxu0 0.0
  %320 = vmatprep.subr.mxu0 0.0
  %321 = vmatpush1.msra.mxu0 0.0
  %322 = vmatprep.subr.mxu0 0.0
  %323 = vmatpush1.msra.mxu0 0.0
  %324 = vmatprep.subr.mxu0 0.0
  %325 = vmatpush1.msra.mxu0 0.0
  %326 = vmatprep.subr.mxu0 0.0
  %327 = vmatpush1.msra.mxu0 0.0
  %328 = vmatprep.subr.mxu0 0.0
  %329 = vmatpush1.msra.mxu0 0.0
  %330 = vmatprep.mubr.f32.mxu0 0.0
  %331 = vmatmul.mubr.f32.gmra.mrb[0].mxu0 %v248
  %v332 = vpop.f32.mrb[0].mxu0
  %v333 = vadd.f32 0.0, %v332
  %v334 = vpop.f32.mrb[0].mxu0
  %335 = vmatprep.mubr.f32.mxu0 0.0
  %336 = vmatmul.mubr.f32.gmra.mrb[0].mxu0 %v249
  %v337 = vpop.f32.mrb[0].mxu0
  %v338 = vadd.f32 0.0, %v337
  %v339 = vpop.f32.mrb[0].mxu0
  %340 = vdwg.mxu0
  %vm341 = vcmp.gt.f32.partialorder %v333, 0.0
  %vm342 = vcmp.gt.f32.partialorder %v338, 0.0
  %v343 = vmin.f32 %v333, 0.0
  %v344 = vmin.f32 %v338, 0.0
  %v345 = vmul.f32 %v343, 1.442695
  %v346 = vpow.pop %v345
  %v347 = vmul.f32 %v344, 1.442695
  %v348 = vpow.pop %v347
  %v349 = vsub.f32 %v346, 1.0
  %v350 = vsub.f32 %v348, 1.0
  %v351 = vsel %vm341, %v333, %v349
  %v352 = vsel %vm342, %v338, %v350
  %v353 = vld [vmem:[%s8] sm:$0xff]
  %v354 = vld [vmem:[%s8 + $0x8] sm:$0xff]
  %v355 = vld [vmem:[%s8 + $0x10] sm:$0xf]
  %356 = vset.pattern.permute.xlu0 0
  %357 = vperm.xlu0 %356, %v353
  %v358 = vpop.permute.xlu0 %357
  %359 = vset.pattern.permute.xlu0 0
  %360 = vperm.xlu0 %359, %v354
  %v361 = vpop.permute.xlu0 %360
  %362 = vset.pattern.permute.xlu0 0
  %363 = vperm.xlu0 %362, %v355
  %v364 = vpop.permute.xlu0 %363
  %vm365 = vcmp.eq.s32.totalorder %v47, %v358
  %vm366 = vcmp.eq.s32.totalorder %v47, %v361
  %vm367 = vcmp.eq.s32.totalorder %v47, %v364
  %v368 = vsel %vm365, 1, 0
  %v369 = vsel %vm366, 1, 0
  %v370 = vsel %vm367, 1, 0
  %v371 = vcvt.s32.f32 %v368
  %v372 = vcvt.s32.f32 %v369
  %v373 = vcvt.s32.f32 %v370
  %v374 = vld [vmem:[%s2] sm:$0x3]
  %v376 = vsel %vm78, %v371, 0
  %v379 = vsel %vm78, %v372, 0
  %v382 = vsel %vm78, %v373, 0
  %v385 = vsel %vm85, %v374, 0
  %387 = vmatprep.subr.mxu0 0.0
  %388 = vmatpush1.msra.mxu0 %v385
  %389 = vmatprep.subr.mxu0 0.0
  %390 = vmatpush1.msra.mxu0 0.0
  %391 = vmatprep.subr.mxu0 0.0
  %392 = vmatpush1.msra.mxu0 0.0
  %393 = vmatprep.subr.mxu0 0.0
  %394 = vmatpush1.msra.mxu0 0.0
  %395 = vmatprep.subr.mxu0 0.0
  %396 = vmatpush1.msra.mxu0 0.0
  %397 = vmatprep.subr.mxu0 0.0
  %398 = vmatpush1.msra.mxu0 0.0
  %399 = vmatprep.subr.mxu0 0.0
  %400 = vmatpush1.msra.mxu0 0.0
  %401 = vmatprep.subr.mxu0 0.0
  %402 = vmatpush1.msra.mxu0 0.0
  %403 = vmatprep.subr.mxu0 0.0
  %404 = vmatpush1.msra.mxu0 0.0
  %405 = vmatprep.subr.mxu0 0.0
  %406 = vmatpush1.msra.mxu0 0.0
  %407 = vmatprep.subr.mxu0 0.0
  %408 = vmatpush1.msra.mxu0 0.0
  %409 = vmatprep.subr.mxu0 0.0
  %410 = vmatpush1.msra.mxu0 0.0
  %411 = vmatprep.subr.mxu0 0.0
  %412 = vmatpush1.msra.mxu0 0.0
  %413 = vmatprep.subr.mxu0 0.0
  %414 = vmatpush1.msra.mxu0 0.0
  %415 = vmatprep.subr.mxu0 0.0
  %416 = vmatpush1.msra.mxu0 0.0
  %417 = vmatprep.subr.mxu0 0.0
  %418 = vmatpush1.msra.mxu0 0.0
  %419 = vmatprep.subr.mxu0 0.0
  %420 = vmatpush1.msra.mxu0 0.0
  %421 = vmatprep.subr.mxu0 0.0
  %422 = vmatpush1.msra.mxu0 0.0
  %423 = vmatprep.subr.mxu0 0.0
  %424 = vmatpush1.msra.mxu0 0.0
  %425 = vmatprep.subr.mxu0 0.0
  %426 = vmatpush1.msra.mxu0 0.0
  %427 = vmatprep.subr.mxu0 0.0
  %428 = vmatpush1.msra.mxu0 0.0
  %429 = vmatprep.subr.mxu0 0.0
  %430 = vmatpush1.msra.mxu0 0.0
  %431 = vmatprep.subr.mxu0 0.0
  %432 = vmatpush1.msra.mxu0 0.0
  %433 = vmatprep.subr.mxu0 0.0
  %434 = vmatpush1.msra.mxu0 0.0
  %435 = vmatprep.subr.mxu0 0.0
  %436 = vmatpush1.msra.mxu0 0.0
  %437 = vmatprep.subr.mxu0 0.0
  %438 = vmatpush1.msra.mxu0 0.0
  %439 = vmatprep.subr.mxu0 0.0
  %440 = vmatpush1.msra.mxu0 0.0
  %441 = vmatprep.subr.mxu0 0.0
  %442 = vmatpush1.msra.mxu0 0.0
  %443 = vmatprep.subr.mxu0 0.0
  %444 = vmatpush1.msra.mxu0 0.0
  %445 = vmatprep.subr.mxu0 0.0
  %446 = vmatpush1.msra.mxu0 0.0
  %447 = vmatprep.subr.mxu0 0.0
  %448 = vmatpush1.msra.mxu0 0.0
  %449 = vmatprep.subr.mxu0 0.0
  %450 = vmatpush1.msra.mxu0 0.0
  %451 = vmatprep.mubr.f32.mxu0 0.0
  %452 = vmatmul.mubr.f32.gmra.mrb[0].mxu0 %v376
  %v453 = vpop.f32.mrb[0].mxu0
  %v454 = vadd.f32 0.0, %v453
  %v455 = vpop.f32.mrb[0].mxu0
  %456 = vmatprep.mubr.f32.mxu0 0.0
  %457 = vmatmul.mubr.f32.gmra.mrb[0].mxu0 %v379
  %v458 = vpop.f32.mrb[0].mxu0
  %v459 = vadd.f32 0.0, %v458
  %v460 = vpop.f32.mrb[0].mxu0
  %461 = vmatprep.mubr.f32.mxu0 0.0
  %462 = vmatmul.mubr.f32.gmra.mrb[0].mxu0 %v382
  %v463 = vpop.f32.mrb[0].mxu0
  %v464 = vadd.f32 0.0, %v463
  %v465 = vpop.f32.mrb[0].mxu0
  %466 = vdwg.mxu0
  %v467 = vld [vmem:[%s1] sm:$0xff]
  %v468 = vld [vmem:[%s1 + $0x8] sm:$0xff]
  %v469 = vld [vmem:[%s1 + $0x10] sm:$0xf]
  %v470 = vmul.f32 %v454, %v467
  %v471 = vmul.f32 %v459, %v468
  %v472 = vmul.f32 %v464, %v469
  %v473 = vld [vmem:[%s10] sm:$0xff]
  %v474 = vld [vmem:[%s10 + $0x8] sm:$0xff]
  %v475 = vld [vmem:[%s10 + $0x10] sm:$0xff]
  %v476 = vld [vmem:[%s10 + $0x18] sm:$0xff]
  %vm477 = vcmask 261120
  %v479 = vsel %vm477, %v470, 0
  %v482 = vsel %vm477, %v471, 0
  %v485 = vsel %vm477, %v472, 0
  %487 = vmatprep.subr.mxu0 0.0
  %488 = vmatpush1.msra.mxu0 %v473
  %489 = vmatprep.subr.mxu0 0.0
  %490 = vmatpush1.msra.mxu0 %v474
  %491 = vmatprep.subr.mxu0 0.0
  %492 = vmatpush1.msra.mxu0 %v475
  %493 = vmatprep.subr.mxu0 0.0
  %494 = vmatpush1.msra.mxu0 %v476
  %495 = vmatprep.subr.mxu0 0.0
  %496 = vmatpush1.msra.mxu0 0.0
  %497 = vmatprep.subr.mxu0 0.0
  %498 = vmatpush1.msra.mxu0 0.0
  %499 = vmatprep.subr.mxu0 0.0
  %500 = vmatpush1.msra.mxu0 0.0
  %501 = vmatprep.subr.mxu0 0.0
  %502 = vmatpush1.msra.mxu0 0.0
  %503 = vmatprep.subr.mxu0 0.0
  %504 = vmatpush1.msra.mxu0 0.0
  %505 = vmatprep.subr.mxu0 0.0
  %506 = vmatpush1.msra.mxu0 0.0
  %507 = vmatprep.subr.mxu0 0.0
  %508 = vmatpush1.msra.mxu0 0.0
  %509 = vmatprep.subr.mxu0 0.0
  %510 = vmatpush1.msra.mxu0 0.0
  %511 = vmatprep.subr.mxu0 0.0
  %512 = vmatpush1.msra.mxu0 0.0
  %513 = vmatprep.subr.mxu0 0.0
  %514 = vmatpush1.msra.mxu0 0.0
  %515 = vmatprep.subr.mxu0 0.0
  %516 = vmatpush1.msra.mxu0 0.0
  %517 = vmatprep.subr.mxu0 0.0
  %518 = vmatpush1.msra.mxu0 0.0
  %519 = vmatprep.subr.mxu0 0.0
  %520 = vmatpush1.msra.mxu0 0.0
  %521 = vmatprep.subr.mxu0 0.0
  %522 = vmatpush1.msra.mxu0 0.0
  %523 = vmatprep.subr.mxu0 0.0
  %524 = vmatpush1.msra.mxu0 0.0
  %525 = vmatprep.subr.mxu0 0.0
  %526 = vmatpush1.msra.mxu0 0.0
  %527 = vmatprep.subr.mxu0 0.0
  %528 = vmatpush1.msra.mxu0 0.0
  %529 = vmatprep.subr.mxu0 0.0
  %530 = vmatpush1.msra.mxu0 0.0
  %531 = vmatprep.subr.mxu0 0.0
  %532 = vmatpush1.msra.mxu0 0.0
  %533 = vmatprep.subr.mxu0 0.0
  %534 = vmatpush1.msra.mxu0 0.0
  %535 = vmatprep.subr.mxu0 0.0
  %536 = vmatpush1.msra.mxu0 0.0
  %537 = vmatprep.subr.mxu0 0.0
  %538 = vmatpush1.msra.mxu0 0.0
  %539 = vmatprep.subr.mxu0 0.0
  %540 = vmatpush1.msra.mxu0 0.0
  %541 = vmatprep.subr.mxu0 0.0
  %542 = vmatpush1.msra.mxu0 0.0
  %543 = vmatprep.subr.mxu0 0.0
  %544 = vmatpush1.msra.mxu0 0.0
  %545 = vmatprep.subr.mxu0 0.0
  %546 = vmatpush1.msra.mxu0 0.0
  %547 = vmatprep.subr.mxu0 0.0
  %548 = vmatpush1.msra.mxu0 0.0
  %549 = vmatprep.subr.mxu0 0.0
  %550 = vmatpush1.msra.mxu0 0.0
  %551 = vmatprep.mubr.f32.mxu0 0.0
  %552 = vmatmul.mubr.f32.gmra.mrb[0].mxu0 %v479
  %v553 = vpop.f32.mrb[0].mxu0
  %v554 = vadd.f32 0.0, %v553
  %v555 = vpop.f32.mrb[0].mxu0
  %556 = vmatprep.mubr.f32.mxu0 0.0
  %557 = vmatmul.mubr.f32.gmra.mrb[0].mxu0 %v482
  %v558 = vpop.f32.mrb[0].mxu0
  %v559 = vadd.f32 0.0, %v558
  %v560 = vpop.f32.mrb[0].mxu0
  %561 = vmatprep.mubr.f32.mxu0 0.0
  %562 = vmatmul.mubr.f32.gmra.mrb[0].mxu0 %v485
  %v563 = vpop.f32.mrb[0].mxu0
  %v564 = vadd.f32 0.0, %v563
  %v565 = vpop.f32.mrb[0].mxu0
  %566 = vdwg.mxu0
  %vm567 = vcmp.gt.f32.partialorder %v554, 0.0
  %vm568 = vcmp.gt.f32.partialorder %v559, 0.0
  %vm569 = vcmp.gt.f32.partialorder %v564, 0.0
  %v570 = vmin.f32 %v554, 0.0
  %v571 = vmin.f32 %v559, 0.0
  %v572 = vmin.f32 %v564, 0.0
  %v573 = vmul.f32 %v570, 1.442695
  %v574 = vpow.pop %v573
  %v575 = vmul.f32 %v571, 1.442695
  %v576 = vpow.pop %v575
  %v577 = vmul.f32 %v572, 1.442695
  %v578 = vpow.pop %v577
  %v579 = vsub.f32 %v574, 1.0
  %v580 = vsub.f32 %v576, 1.0
  %v581 = vsub.f32 %v578, 1.0
  %v582 = vsel %vm567, %v554, %v579
  %v583 = vsel %vm568, %v559, %v580
  %v584 = vsel %vm569, %v564, %v581
  %v585 = vld [vmem:[%s12] sm:$0x1]
  %v587 = vlaneseq
  %v588 = vshrl.u32 %v587, 7
  %v589 = vsub.s32 0, %v588
  %v590 = vrot.slane %v585, %v589
  %v592 = vmul.f32 %v582, %v590
  %v593 = vmul.f32 %v583, %v590
  %v594 = vmul.f32 %v584, %v590
  %v595 = vsel %vm477, %v592, 0.0
  %596 = vadd.xlane.f32.xlu0 %v595
  %v597 = vpop.xlane.xlu0 %596
  %v598 = vsel %vm477, %v593, 0.0
  %599 = vadd.xlane.f32.xlu0 %v598
  %v600 = vpop.xlane.xlu0 %599
  %vm601 = vcmask 257024
  %v602 = vsel %vm601, %v594, 0.0
  %603 = vadd.xlane.f32.xlu0 %v602
  %v604 = vpop.xlane.xlu0 %603
  %v605 = vld [vmem:[%s6] sm:$0xff]
  %v606 = vld [vmem:[%s6 + $0x8] sm:$0xff]
  %v607 = vld [vmem:[%s6 + $0x10] sm:$0xf]
  %608 = vset.pattern.permute.xlu0 0
  %609 = vperm.xlu0 %608, %v605
  %v610 = vpop.permute.xlu0 %609
  %611 = vset.pattern.permute.xlu0 0
  %612 = vperm.xlu0 %611, %v606
  %v613 = vpop.permute.xlu0 %612
  %614 = vset.pattern.permute.xlu0 0
  %615 = vperm.xlu0 %614, %v607
  %v616 = vpop.permute.xlu0 %615
  %vm617 = vcmp.eq.s32.totalorder %v47, %v610
  %vm618 = vcmp.eq.s32.totalorder %v47, %v613
  %vm619 = vcmp.eq.s32.totalorder %v47, %v616
  %v620 = vsel %vm617, 1, 0
  %v621 = vsel %vm618, 1, 0
  %v622 = vsel %vm619, 1, 0
  %v623 = vcvt.s32.f32 %v620
  %v624 = vcvt.s32.f32 %v621
  %v625 = vcvt.s32.f32 %v622
  %v626 = vld [vmem:[%s4] sm:$0x1]
  %v628 = vlaneseq
  %v629 = vshrl.u32 %v628, 7
  %v630 = vsub.s32 0, %v629
  %v631 = vrot.slane %v626, %v630
  %v633 = vmul.f32 %v623, %v631
  %v634 = vmul.f32 %v624, %v631
  %v635 = vmul.f32 %v625, %v631
  %vm636 = vcmask 97280
  %v637 = vsel %vm636, %v633, 0.0
  %638 = vadd.xlane.f32.xlu0 %v637
  %v639 = vpop.xlane.xlu0 %638
  %v640 = vsel %vm636, %v634, 0.0
  %641 = vadd.xlane.f32.xlu0 %v640
  %v642 = vpop.xlane.xlu0 %641
  %vm643 = vcmask 93184
  %v644 = vsel %vm643, %v635, 0.0
  %645 = vadd.xlane.f32.xlu0 %v644
  %v646 = vpop.xlane.xlu0 %645
  %v647 = vmul.f32 %v639, %v597
  %v648 = vmul.f32 %v642, %v600
  %v649 = vmul.f32 %v646, %v604
  %v650 = vld [vmem:[%s7] sm:$0x1]
  %v651 = vlaneseq
  %v652 = vshrl.u32 %v651, 7
  %v653 = vadd.s32 %v652, 8
  %v654 = vlaneseq
  %v655 = vshrl.u32 %v654, 7
  %v656 = vsub.s32 0, %v655
  %v657 = vrot.slane %v650, %v656
  %vm658 = vcmp.eq.s32.totalorder %v652, %v657
  %vm659 = vcmp.eq.s32.totalorder %v653, %v657
  %v660 = vsel %vm658, 1, 0
  %v661 = vsel %vm659, 1, 0
  %v662 = vcvt.s32.f32 %v660
  %v663 = vcvt.s32.f32 %v661
  %vm664 = vcmask 162816
  %v666 = vsel %vm664, %v662, 0
  %v669 = vsel %vm664, %v663, 0
  %vm671 = vcmask 1043456
  %v673 = vsel %vm671, %v649, 0
  %675 = vmatprep.subr.mxu0 0.0
  %676 = vmatpush1.msra.mxu0 %v647
  %677 = vmatprep.subr.mxu0 0.0
  %678 = vmatpush1.msra.mxu0 %v648
  %679 = vmatprep.subr.mxu0 0.0
  %680 = vmatpush1.msra.mxu0 %v673
  %681 = vmatprep.subr.mxu0 0.0
  %682 = vmatpush1.msra.mxu0 0.0
  %683 = vmatprep.subr.mxu0 0.0
  %684 = vmatpush1.msra.mxu0 0.0
  %685 = vmatprep.subr.mxu0 0.0
  %686 = vmatpush1.msra.mxu0 0.0
  %687 = vmatprep.subr.mxu0 0.0
  %688 = vmatpush1.msra.mxu0 0.0
  %689 = vmatprep.subr.mxu0 0.0
  %690 = vmatpush1.msra.mxu0 0.0
  %691 = vmatprep.subr.mxu0 0.0
  %692 = vmatpush1.msra.mxu0 0.0
  %693 = vmatprep.subr.mxu0 0.0
  %694 = vmatpush1.msra.mxu0 0.0
  %695 = vmatprep.subr.mxu0 0.0
  %696 = vmatpush1.msra.mxu0 0.0
  %697 = vmatprep.subr.mxu0 0.0
  %698 = vmatpush1.msra.mxu0 0.0
  %699 = vmatprep.subr.mxu0 0.0
  %700 = vmatpush1.msra.mxu0 0.0
  %701 = vmatprep.subr.mxu0 0.0
  %702 = vmatpush1.msra.mxu0 0.0
  %703 = vmatprep.subr.mxu0 0.0
  %704 = vmatpush1.msra.mxu0 0.0
  %705 = vmatprep.subr.mxu0 0.0
  %706 = vmatpush1.msra.mxu0 0.0
  %707 = vmatprep.subr.mxu0 0.0
  %708 = vmatpush1.msra.mxu0 0.0
  %709 = vmatprep.subr.mxu0 0.0
  %710 = vmatpush1.msra.mxu0 0.0
  %711 = vmatprep.subr.mxu0 0.0
  %712 = vmatpush1.msra.mxu0 0.0
  %713 = vmatprep.subr.mxu0 0.0
  %714 = vmatpush1.msra.mxu0 0.0
  %715 = vmatprep.subr.mxu0 0.0
  %716 = vmatpush1.msra.mxu0 0.0
  %717 = vmatprep.subr.mxu0 0.0
  %718 = vmatpush1.msra.mxu0 0.0
  %719 = vmatprep.subr.mxu0 0.0
  %720 = vmatpush1.msra.mxu0 0.0
  %721 = vmatprep.subr.mxu0 0.0
  %722 = vmatpush1.msra.mxu0 0.0
  %723 = vmatprep.subr.mxu0 0.0
  %724 = vmatpush1.msra.mxu0 0.0
  %725 = vmatprep.subr.mxu0 0.0
  %726 = vmatpush1.msra.mxu0 0.0
  %727 = vmatprep.subr.mxu0 0.0
  %728 = vmatpush1.msra.mxu0 0.0
  %729 = vmatprep.subr.mxu0 0.0
  %730 = vmatpush1.msra.mxu0 0.0
  %731 = vmatprep.subr.mxu0 0.0
  %732 = vmatpush1.msra.mxu0 0.0
  %733 = vmatprep.subr.mxu0 0.0
  %734 = vmatpush1.msra.mxu0 0.0
  %735 = vmatprep.subr.mxu0 0.0
  %736 = vmatpush1.msra.mxu0 0.0
  %737 = vmatprep.subr.mxu0 0.0
  %738 = vmatpush1.msra.mxu0 0.0
  %739 = vmatprep.mubr.f32.mxu0 0.0
  %740 = vmatmul.mubr.f32.gmra.mrb[0].mxu0 %v666
  %v741 = vpop.f32.mrb[0].mxu0
  %v742 = vadd.f32 0.0, %v741
  %v743 = vpop.f32.mrb[0].mxu0
  %744 = vmatprep.mubr.f32.mxu0 0.0
  %745 = vmatmul.mubr.f32.gmra.mrb[0].mxu0 %v669
  %v746 = vpop.f32.mrb[0].mxu0
  %v747 = vadd.f32 0.0, %v746
  %v748 = vpop.f32.mrb[0].mxu0
  %749 = vdwg.mxu0
  %v750 = vld [vmem:[%s11] sm:$0x1]
  %v752 = vlaneseq
  %v753 = vshrl.u32 %v752, 7
  %v754 = vsub.s32 0, %v753
  %v755 = vrot.slane %v750, %v754
  %v757 = vmul.f32 %v351, %v755
  %v758 = vmul.f32 %v352, %v755
  %v759 = vsel %vm477, %v757, 0.0
  %760 = vadd.xlane.f32.xlu0 %v759
  %v761 = vpop.xlane.xlu0 %760
  %v762 = vsel %vm601, %v758, 0.0
  %763 = vadd.xlane.f32.xlu0 %v762
  %v764 = vpop.xlane.xlu0 %763
  %v765 = vsel %vm54, %v761, -1e+30
  %v766 = vsel %vm55, %v764, -1e+30
  %v767 = vsel %vm78, %v765, -inf
  %vm768 = vcmask 11264
  %v769 = vsel %vm768, %v766, -inf
  %v770 = vmax.f32 %v767, %v769
  %v771 = vrot.slane %v770, 4
  %v772 = vmax.f32 %v770, %v771
  %v773 = vrot.slane %v772, 2
  %v774 = vmax.f32 %v772, %v773
  %v775 = vrot.slane %v774, 1
  %v776 = vmax.f32 %v774, %v775
  %v777 = vmul.f32 %v58, %v776
  %v778 = vmul.f32 %v59, %v776
  %v779 = vsel %vm78, %v777, 0.0
  %780 = vadd.xlane.f32.xlu0 %v779
  %v781 = vpop.xlane.xlu0 %780
  %v782 = vsel %vm768, %v778, 0.0
  %783 = vadd.xlane.f32.xlu0 %v782
  %v784 = vpop.xlane.xlu0 %783
  %v785 = vsub.f32 %v761, %v781
  %v786 = vsub.f32 %v764, %v784
  %v787 = vmul.f32 %v785, 1.442695
  %v788 = vpow.pop %v787
  %v789 = vmul.f32 %v786, 1.442695
  %v790 = vpow.pop %v789
  %v791 = vmul.f32 %v58, %v788
  %v792 = vmul.f32 %v59, %v790
  %v793 = vsel %vm78, %v791, 0.0
  %v794 = vsel %vm768, %v792, 0.0
  %v795 = vadd.f32 %v793, %v794
  %v796 = vrot.slane %v795, 4
  %v797 = vadd.f32 %v795, %v796
  %v798 = vrot.slane %v797, 2
  %v799 = vadd.f32 %v797, %v798
  %v800 = vrot.slane %v799, 1
  %v801 = vadd.f32 %v799, %v800
  %v802 = vmul.f32 %v58, %v801
  %v803 = vmul.f32 %v59, %v801
  %v804 = vsel %vm78, %v802, 0.0
  %805 = vadd.xlane.f32.xlu0 %v804
  %v806 = vpop.xlane.xlu0 %805
  %v807 = vsel %vm768, %v803, 0.0
  %808 = vadd.xlane.f32.xlu0 %v807
  %v809 = vpop.xlane.xlu0 %808
  %v810 = vrcp.pop %v806
  %v811 = vrcp.pop %v809
  %v812 = vmul.f32 %v788, %v810
  %v813 = vmul.f32 %v790, %v811
  %815 = vset.pattern.permute.xlu0 0
  %816 = vperm.xlu0 %815, %v742
  %v817 = vpop.permute.xlu0 %816
  %820 = vset.pattern.permute.xlu0 0
  %821 = vperm.xlu0 %820, %v747
  %v822 = vpop.permute.xlu0 %821
  %v824 = vsel %vm54, %v817, -1e+30
  %v825 = vsel %vm55, %v822, -1e+30
  %v826 = vsel %vm78, %v824, -inf
  %v827 = vsel %vm768, %v825, -inf
  %v828 = vmax.f32 %v826, %v827
  %v829 = vrot.slane %v828, 4
  %v830 = vmax.f32 %v828, %v829
  %v831 = vrot.slane %v830, 2
  %v832 = vmax.f32 %v830, %v831
  %v833 = vrot.slane %v832, 1
  %v834 = vmax.f32 %v832, %v833
  %v835 = vmul.f32 %v58, %v834
  %v836 = vmul.f32 %v59, %v834
  %v837 = vsel %vm78, %v835, 0.0
  %838 = vadd.xlane.f32.xlu0 %v837
  %v839 = vpop.xlane.xlu0 %838
  %v840 = vsel %vm768, %v836, 0.0
  %841 = vadd.xlane.f32.xlu0 %v840
  %v842 = vpop.xlane.xlu0 %841
  %v843 = vsub.f32 %v742, %v839
  %v844 = vsub.f32 %v747, %v842
  %v845 = vmul.f32 %v843, 1.442695
  %v846 = vpow.pop %v845
  %v847 = vmul.f32 %v844, 1.442695
  %v848 = vpow.pop %v847
  %850 = vset.pattern.permute.xlu0 0
  %851 = vperm.xlu0 %850, %v846
  %v852 = vpop.permute.xlu0 %851
  %855 = vset.pattern.permute.xlu0 0
  %856 = vperm.xlu0 %855, %v848
  %v857 = vpop.permute.xlu0 %856
  %v859 = vmul.f32 %v58, %v852
  %v860 = vmul.f32 %v59, %v857
  %v861 = vsel %vm78, %v859, 0.0
  %v862 = vsel %vm768, %v860, 0.0
  %v863 = vadd.f32 %v861, %v862
  %v864 = vrot.slane %v863, 4
  %v865 = vadd.f32 %v863, %v864
  %v866 = vrot.slane %v865, 2
  %v867 = vadd.f32 %v865, %v866
  %v868 = vrot.slane %v867, 1
  %v869 = vadd.f32 %v867, %v868
  %v870 = vmul.f32 %v58, %v869
  %v871 = vmul.f32 %v59, %v869
  %v872 = vsel %vm78, %v870, 0.0
  %873 = vadd.xlane.f32.xlu0 %v872
  %v874 = vpop.xlane.xlu0 %873
  %v875 = vsel %vm768, %v871, 0.0
  %876 = vadd.xlane.f32.xlu0 %v875
  %v877 = vpop.xlane.xlu0 %876
  %v878 = vrcp.pop %v874
  %v879 = vrcp.pop %v877
  %v880 = vmul.f32 %v846, %v878
  %v881 = vmul.f32 %v848, %v879
  %v882 = vmul.f32 %v236, %v880
  %v883 = vmul.f32 %v241, %v881
  %v884 = vsub.f32 1.0, %v236
  %v885 = vsub.f32 1.0, %v241
  %v886 = vmul.f32 %v884, %v812
  %v887 = vmul.f32 %v885, %v813
  %v888 = vadd.f32 %v882, %v886
  %v889 = vadd.f32 %v883, %v887
  %vm890 = vcmask 7168
  %891 = vst.msk [vmem:[%s13] sm:$0xff] %vm890, %v888
  %vm892 = vcmask 3072
  %893 = vst.msk [vmem:[%s13 + $0x8] sm:$0xf] %vm892, %v889
  // Predicated region
  $region54: #{tpu_custom_call.1} parent=0 // pred_check
    _
  $region55: #{tpu_custom_call.1} parent=0 // pred_check_branch
    %895 = sbr.rel (0) target = $region57
  $region56: #{tpu_custom_call.1} parent=0 // pred_region
    _
  $region57: #{tpu_custom_call.1} parent=0 // pred_fallthru
    _
  // Predicated region
  $region58: #{tpu_custom_call.1} parent=0 // pred_check
    _
  $region59: #{tpu_custom_call.1} parent=0 // pred_check_branch
    %897 = sbr.rel (0) target = $region61
  $region60: #{tpu_custom_call.1} parent=0 // pred_region
    _
  $region61: #{tpu_custom_call.1} parent=0 // pred_fallthru
    _

</llo_original>
